<compile_context>
chip_gen: v7x
topology: tpu7x:2x2x1
jax: 0.10.0
libtpu: 0.0.40
codegen_flags: <defaults>
</compile_context>

<pallas_src>
import jax
import jax.numpy as jnp
from jax.experimental import pallas as pl
from jax.experimental.pallas import tpu as pltpu


def _round_up(n, m):
    return (n + m - 1) // m * m


def mlp_kernel(x_ref, w1_ref, b1_ref, w2_ref, b2_ref, w3_ref, b3_ref, o_ref):
    # fc1 + ReLU : MXU matmul with f32 accumulation, VPU bias-add + max (f32).
    h1 = jnp.dot(x_ref[...], w1_ref[...], preferred_element_type=jnp.float32)
    h1 = jnp.maximum(h1 + b1_ref[...], 0.0)
    # fc2 + ReLU
    h2 = jnp.dot(h1.astype(w2_ref.dtype), w2_ref[...],
                 preferred_element_type=jnp.float32)
    h2 = jnp.maximum(h2 + b2_ref[...], 0.0)
    # fc3 (single output unit): VPU multiply + lane reduction -> (TB, 1)
    # directly, so the store and HBM writeback stay 1 column wide.
    out = jnp.sum(h2 * w3_ref[...].astype(jnp.float32), axis=-1, keepdims=True)
    o_ref[...] = (out + b3_ref[...]).astype(o_ref.dtype)


def prepare_params(params, compute_dtype=jnp.float32):
    """One-time weight prep: pad hidden dims to 128 lanes and cast weights.

    Zero-padding is numerically exact: padded hidden columns get bias 0 and
    ReLU(0) = 0; padded rows/entries of the following weights contribute 0.
    """
    w1, b1 = params["w1"], params["b1"]
    w2, b2 = params["w2"], params["b2"]
    w3, b3 = params["w3"], params["b3"]

    F, H = w1.shape
    H2 = w2.shape[1]
    HP = _round_up(H, 128)
    H2P = _round_up(H2, 128)

    w1p = jnp.zeros((F, HP), compute_dtype).at[:, :H].set(w1.astype(compute_dtype))
    b1p = jnp.zeros((1, HP), jnp.float32).at[:, :H].set(
        b1.reshape(1, H).astype(jnp.float32))
    w2p = jnp.zeros((HP, H2P), compute_dtype).at[:H, :H2].set(w2.astype(compute_dtype))
    b2p = jnp.zeros((1, H2P), jnp.float32).at[:, :H2].set(
        b2.reshape(1, H2).astype(jnp.float32))
    w3p = jnp.zeros((1, H2P), compute_dtype).at[:, :H2].set(
        w3.reshape(1, H2).astype(compute_dtype))
    b3p = b3.reshape(1, 1).astype(jnp.float32)
    return {"w1": w1p, "b1": b1p, "w2": w2p, "b2": b2p, "w3": w3p, "b3": b3p}


def nutrition_model_forward(x, prepared, *, block_b=8192):
    """x: (B, input_size). prepared: output of prepare_params. Returns (B, 1) f32."""
    w1p, b1p = prepared["w1"], prepared["b1"]
    w2p, b2p = prepared["w2"], prepared["b2"]
    w3p, b3p = prepared["w3"], prepared["b3"]
    compute_dtype = w1p.dtype

    B, F = x.shape
    HP = w1p.shape[1]
    H2P = w2p.shape[1]

    # Batch tiling: large batches stream through in TB-row tiles while the
    # weights stay VMEM-resident (constant index_maps). The last tile may be
    # ragged; Pallas clips the DMAs, and overhang rows are simply never
    # written, so no wrapper-side padding copy of x is needed.
    TB = min(block_b, _round_up(B, 8))
    grid = (pl.cdiv(B, TB),)

    xp = x.astype(compute_dtype)

    out = pl.pallas_call(
        mlp_kernel,
        out_shape=jax.ShapeDtypeStruct((B, 1), jnp.float32),
        grid=grid,
        in_specs=[
            pl.BlockSpec((TB, F), lambda i: (i, 0)),     # x: tiled over batch
            pl.BlockSpec((F, HP), lambda i: (0, 0)),     # weights / biases:
            pl.BlockSpec((1, HP), lambda i: (0, 0)),     #   VMEM-resident
            pl.BlockSpec((HP, H2P), lambda i: (0, 0)),   #   across all
            pl.BlockSpec((1, H2P), lambda i: (0, 0)),    #   grid steps
            pl.BlockSpec((1, H2P), lambda i: (0, 0)),
            pl.BlockSpec((1, 1), lambda i: (0, 0)),
        ],
        out_specs=pl.BlockSpec((TB, 1), lambda i: (i, 0)),
        compiler_params=pltpu.CompilerParams(
            dimension_semantics=("parallel",),           # v7x: shard over 2 TCs
            vmem_limit_bytes=32 * 1024 * 1024,           # fits TB=8192 f32 tiles
        ),
    )(xp, w1p, b1p, w2p, b2p, w3p, b3p)
    return out


def init_params(key, input_size, hidden_size=64):
    """Deterministic init matching nn.Linear shapes (weights stored as (in, out))."""
    ks = jax.random.split(key, 6)
    h2 = hidden_size // 2

    def lin(kw, kb, fan_in, fan_out):
        bound = 1.0 / jnp.sqrt(jnp.float32(fan_in))
        w = jax.random.uniform(kw, (fan_in, fan_out), jnp.float32, -bound, bound)
        b = jax.random.uniform(kb, (1, fan_out), jnp.float32, -bound, bound)
        return w, b

    w1, b1 = lin(ks[0], ks[1], input_size, hidden_size)
    w2, b2 = lin(ks[2], ks[3], hidden_size, h2)
    w3, b3 = lin(ks[4], ks[5], h2, 1)
    return {"w1": w1, "b1": b1, "w2": w2, "b2": b2, "w3": w3, "b3": b3}


def _reference(x, params):
    h = jnp.maximum(x @ params["w1"] + params["b1"], 0.0)
    h = jnp.maximum(h @ params["w2"] + params["b2"], 0.0)
    return h @ params["w3"] + params["b3"]


if __name__ == "__main__":
    key = jax.random.PRNGKey(0)
    k_x, k_p, k_big = jax.random.split(key, 3)

    input_size = 16
    hidden_size = 64
    batch = 8

    params = init_params(k_p, input_size, hidden_size)
    prepared = prepare_params(params)   # one-time weight padding/cast (hoisted)

    # Small-batch check (single grid step).
    x = jax.random.normal(k_x, (batch, input_size), jnp.float32)
    out = jax.block_until_ready(nutrition_model_forward(x, prepared))
    ref = _reference(x, params)
    assert out.shape == (batch, 1)
    assert jnp.allclose(out, ref, atol=1e-5, rtol=1e-5)

    # Larger, non-divisible batch: multi-step grid with a ragged last tile
    # (exercises the no-prepad path; overhang rows are never written).
    x_big = jax.random.normal(k_big, (1000, input_size), jnp.float32)
    out_big = jax.block_until_ready(
        nutrition_model_forward(x_big, prepared, block_b=256))
    ref_big = _reference(x_big, params)
    assert out_big.shape == (1000, 1)
    assert jnp.allclose(out_big, ref_big, atol=1e-5, rtol=1e-5)

    print("KERNEL_OK")
</pallas_src>

<mosaic_0001>
module attributes {stable_mosaic.version = 11 : i64} {
  func.func @mlp_kernel(%arg0: i32, %arg1: memref<8x16xf32, #tpu.memory_space<vmem>>, %arg2: memref<16x128xf32, #tpu.memory_space<vmem>>, %arg3: memref<1x128xf32, #tpu.memory_space<vmem>>, %arg4: memref<128x128xf32, #tpu.memory_space<vmem>>, %arg5: memref<1x128xf32, #tpu.memory_space<vmem>>, %arg6: memref<1x128xf32, #tpu.memory_space<vmem>>, %arg7: memref<1x1xf32, #tpu.memory_space<vmem>>, %arg8: memref<8x1xf32, #tpu.memory_space<vmem>>) attributes {dimension_semantics = [#tpu.dimension_semantics<parallel>], iteration_bounds = array<i64: 1>, scalar_prefetch = 0 : i64, scratch_operands = 0 : i64, tpu.core_type = #tpu.core_type<tc>, window_params = [{transform_indices = @transform_0, window_bounds = array<i64: 8, 16>}, {pipeline_mode = #tpu.pipeline_mode<synchronous>, transform_indices = @transform_1, window_bounds = array<i64: 16, 128>}, {pipeline_mode = #tpu.pipeline_mode<synchronous>, transform_indices = @transform_2, window_bounds = array<i64: 1, 128>}, {pipeline_mode = #tpu.pipeline_mode<synchronous>, transform_indices = @transform_3, window_bounds = array<i64: 128, 128>}, {pipeline_mode = #tpu.pipeline_mode<synchronous>, transform_indices = @transform_4, window_bounds = array<i64: 1, 128>}, {pipeline_mode = #tpu.pipeline_mode<synchronous>, transform_indices = @transform_5, window_bounds = array<i64: 1, 128>}, {pipeline_mode = #tpu.pipeline_mode<synchronous>, transform_indices = @transform_6, window_bounds = array<i64: 1, 1>}, {transform_indices = @transform_7, window_bounds = array<i64: 8, 1>}]} {
    %c0 = arith.constant 0 : index
    %c0_0 = arith.constant 0 : index
    %0 = vector.load %arg1[%c0, %c0_0] : memref<8x16xf32, #tpu.memory_space<vmem>>, vector<8x16xf32>
    %c0_1 = arith.constant 0 : index
    %c0_2 = arith.constant 0 : index
    %1 = vector.load %arg2[%c0_1, %c0_2] : memref<16x128xf32, #tpu.memory_space<vmem>>, vector<16x128xf32>
    %cst = arith.constant dense<0.000000e+00> : vector<8x128xf32>
    %2 = tpu.matmul %0, %1, %cst {dimension_numbers = #tpu.dot_dimension_numbers<[1], [0], [0], [1], [0, 0, 1, 1], [], []>} : vector<8x16xf32>, vector<16x128xf32>, vector<8x128xf32> -> vector<8x128xf32>
    %c0_3 = arith.constant 0 : index
    %c0_4 = arith.constant 0 : index
    %3 = vector.load %arg3[%c0_3, %c0_4] : memref<1x128xf32, #tpu.memory_space<vmem>>, vector<1x128xf32>
    %4 = vector.broadcast %3 : vector<1x128xf32> to vector<8x128xf32>
    %5 = arith.addf %2, %4 : vector<8x128xf32>
    %cst_5 = arith.constant 0.000000e+00 : f32
    %6 = vector.broadcast %cst_5 : f32 to vector<8x128xf32>
    %7 = arith.maximumf %5, %6 : vector<8x128xf32>
    %c0_6 = arith.constant 0 : index
    %c0_7 = arith.constant 0 : index
    %8 = vector.load %arg4[%c0_6, %c0_7] : memref<128x128xf32, #tpu.memory_space<vmem>>, vector<128x128xf32>
    %cst_8 = arith.constant dense<0.000000e+00> : vector<8x128xf32>
    %9 = tpu.matmul %7, %8, %cst_8 {dimension_numbers = #tpu.dot_dimension_numbers<[1], [0], [0], [1], [0, 0, 1, 1], [], []>} : vector<8x128xf32>, vector<128x128xf32>, vector<8x128xf32> -> vector<8x128xf32>
    %c0_9 = arith.constant 0 : index
    %c0_10 = arith.constant 0 : index
    %10 = vector.load %arg5[%c0_9, %c0_10] : memref<1x128xf32, #tpu.memory_space<vmem>>, vector<1x128xf32>
    %11 = vector.broadcast %10 : vector<1x128xf32> to vector<8x128xf32>
    %12 = arith.addf %9, %11 : vector<8x128xf32>
    %cst_11 = arith.constant 0.000000e+00 : f32
    %13 = vector.broadcast %cst_11 : f32 to vector<8x128xf32>
    %14 = arith.maximumf %12, %13 : vector<8x128xf32>
    %c0_12 = arith.constant 0 : index
    %c0_13 = arith.constant 0 : index
    %15 = vector.load %arg6[%c0_12, %c0_13] : memref<1x128xf32, #tpu.memory_space<vmem>>, vector<1x128xf32>
    %16 = vector.broadcast %15 : vector<1x128xf32> to vector<8x128xf32>
    %17 = arith.mulf %14, %16 : vector<8x128xf32>
    %cst_14 = arith.constant dense<0.000000e+00> : vector<8xf32>
    %18 = vector.multi_reduction <add>, %17, %cst_14 [1] : vector<8x128xf32> to vector<8xf32>
    %19 = vector.shape_cast %18 : vector<8xf32> to vector<8x1xf32>
    %c0_15 = arith.constant 0 : index
    %c0_16 = arith.constant 0 : index
    %20 = vector.load %arg7[%c0_15, %c0_16] : memref<1x1xf32, #tpu.memory_space<vmem>>, vector<1x1xf32>
    %21 = vector.broadcast %20 : vector<1x1xf32> to vector<8x1xf32>
    %22 = arith.addf %19, %21 : vector<8x1xf32>
    %c0_17 = arith.constant 0 : index
    %c0_18 = arith.constant 0 : index
    %23 = vector.load %arg8[%c0_17, %c0_18] : memref<8x1xf32, #tpu.memory_space<vmem>>, vector<8x1xf32>
    tpu.vector_store %arg8[%c0_17, %c0_18], %22 {strides = array<i32>} : memref<8x1xf32, #tpu.memory_space<vmem>>, vector<8x1xf32>,
    return
  }
  func.func @transform_0(%arg0: i32) -> (i32, i32) {
    %c0_i32 = arith.constant 0 : i32
    %c0_i32_0 = arith.constant 0 : i32
    return %arg0, %c0_i32 : i32, i32
  }
  func.func @transform_1(%arg0: i32) -> (i32, i32) {
    %c0_i32 = arith.constant 0 : i32
    %c0_i32_0 = arith.constant 0 : i32
    %c0_i32_1 = arith.constant 0 : i32
    return %c0_i32, %c0_i32_0 : i32, i32
  }
  func.func @transform_2(%arg0: i32) -> (i32, i32) {
    %c0_i32 = arith.constant 0 : i32
    %c0_i32_0 = arith.constant 0 : i32
    %c0_i32_1 = arith.constant 0 : i32
    return %c0_i32, %c0_i32_0 : i32, i32
  }
  func.func @transform_3(%arg0: i32) -> (i32, i32) {
    %c0_i32 = arith.constant 0 : i32
    %c0_i32_0 = arith.constant 0 : i32
    %c0_i32_1 = arith.constant 0 : i32
    return %c0_i32, %c0_i32_0 : i32, i32
  }
  func.func @transform_4(%arg0: i32) -> (i32, i32) {
    %c0_i32 = arith.constant 0 : i32
    %c0_i32_0 = arith.constant 0 : i32
    %c0_i32_1 = arith.constant 0 : i32
    return %c0_i32, %c0_i32_0 : i32, i32
  }
  func.func @transform_5(%arg0: i32) -> (i32, i32) {
    %c0_i32 = arith.constant 0 : i32
    %c0_i32_0 = arith.constant 0 : i32
    %c0_i32_1 = arith.constant 0 : i32
    return %c0_i32, %c0_i32_0 : i32, i32
  }
  func.func @transform_6(%arg0: i32) -> (i32, i32) {
    %c0_i32 = arith.constant 0 : i32
    %c0_i32_0 = arith.constant 0 : i32
    %c0_i32_1 = arith.constant 0 : i32
    return %c0_i32, %c0_i32_0 : i32, i32
  }
  func.func @transform_7(%arg0: i32) -> (i32, i32) {
    %c0_i32 = arith.constant 0 : i32
    %c0_i32_0 = arith.constant 0 : i32
    return %arg0, %c0_i32 : i32, i32
  }
}

</mosaic_0001>

<llo_original>
// kernel: tpu_custom_call.1
$region0: #{tpu_custom_call.1}
  #allocation0 [shape = 'u32[]', space=smem, size = 0x4, offset = 0x4, fixed_abs, tag = 'smem constant byte address 0x4 - core index']
  #allocation1 [shape = 'u32[144,128]{1,0:T(1,128)}', space=vmem, size = 0x12000, scoped, tag = 'internal scratch']
  #allocation2 [shape = 'f32[1,1]{1,0:T(1,128)S(1)}', space=vmem, size = 0x200, scoped, tag = 'scoped memory for tpu_custom_call.1']
  %s0 = inlined_call_operand.hbm [shape: f32[8,16], index: 0, kind: input, shape index: {}]
  %s1 = inlined_call_operand.hbm [shape: f32[16,128], index: 1, kind: input, shape index: {}]
  %s2 = inlined_call_operand.vmem [shape: f32[1,128], index: 2, kind: input, shape index: {}]
  %s3 = inlined_call_operand.hbm [shape: f32[128,128], index: 3, kind: input, shape index: {}]
  %s4 = inlined_call_operand.vmem [shape: f32[1,128], index: 4, kind: input, shape index: {}]
  %s5 = inlined_call_operand.vmem [shape: f32[1,128], index: 5, kind: input, shape index: {}]
  %s6 = inlined_call_operand.<no memory space> [shape: f32[1,1], index: 6, kind: input, shape index: {}]
  %s7 = inlined_call_operand.vmem [shape: f32[8,1], index: 7, kind: output, shape index: {}]
  %s8 = sld [smem:[#allocation0]]
  $region50: #{tpu_custom_call.1} parent=0
    _
  %s10 = ssub.s32 1, %s8
  %s11 = scalar_select 0, %s10, %s8
  %v12 = vstv %s6
  %13 = vst [vmem:[#allocation2] sm:$0x1] %v12
  $region1: #{tpu_custom_call.1} parent=0
    #allocation3 [shape = 'u8[4096]{0}', space=vmem, size = 0x1000, scoped, tag = 'input window, operand 0, single buffered']
    #allocation4 [shape = 's32[1]{0}', space=sflag, size = 0x4, scoped, tag = 'scoped memory for tpu_custom_call.1']
    #allocation5 [shape = 'u8[8192]{0}', space=vmem, size = 0x2000, scoped, tag = 'input window, operand 1, single buffered']
    #allocation6 [shape = 's32[1]{0}', space=sflag, size = 0x4, scoped, tag = 'scoped memory for tpu_custom_call.1']
    #allocation7 [shape = 'u8[65536]{0}', space=vmem, size = 0x10000, scoped, tag = 'input window, operand 3, single buffered']
    %14 = vsyncpa [#allocation4], 0
    %15 = vsyncpa [#allocation6], 0
    // Predicated region
    $region2: #{tpu_custom_call.1} parent=1 // pred_check
      _
    $region3: #{tpu_custom_call.1} parent=1 // pred_check_branch
      %17 = sbr.rel (0) target = $region5
    $region4: #{tpu_custom_call.1} parent=1 // pred_region
      %s19 = ssub.s32 128, 128
      %20 = vsyncadd [#allocation4], %s19
      %s22 = sshll.u32 [#allocation3], 4
      %s23 = int_to_ptr.vmem [resolvable:$true] %s22
      %25 = dma.hbm_to_vmem [thread:$0]  %s0, 128, %s23, [#allocation4]
    $region5: #{tpu_custom_call.1} parent=1 // pred_fallthru
      _
    // Predicated region
    $region6: #{tpu_custom_call.1} parent=1 // pred_check
      _
    $region7: #{tpu_custom_call.1} parent=1 // pred_check_branch
      %27 = sbr.rel (0) target = $region9
    $region8: #{tpu_custom_call.1} parent=1 // pred_region
      %s29 = ssub.s32 256, 256
      %30 = vsyncadd [#allocation6], %s29
      %s31 = sshll.u32 [#allocation5], 4
      %s32 = int_to_ptr.vmem [resolvable:$true] %s31
      %37 = dma.hbm_to_vmem [thread:$0]  %s1, 256, %s32, [#allocation6], 128, 128, 8
    $region9: #{tpu_custom_call.1} parent=1 // pred_fallthru
      _
    // Predicated region
    $region10: #{tpu_custom_call.1} parent=1 // pred_check
      _
    $region11: #{tpu_custom_call.1} parent=1 // pred_check_branch
      %39 = sbr.rel (0) target = $region13
    $region12: #{tpu_custom_call.1} parent=1 // pred_region
      _
    $region13: #{tpu_custom_call.1} parent=1 // pred_fallthru
      _
    // Predicated region
    $region14: #{tpu_custom_call.1} parent=1 // pred_check
      _
    $region15: #{tpu_custom_call.1} parent=1 // pred_check_branch
      %41 = sbr.rel (0) target = $region17
    $region16: #{tpu_custom_call.1} parent=1 // pred_region
      %s43 = ssub.s32 2048, 2048
      %44 = vsyncadd [#allocation6], %s43
      %s45 = sshll.u32 [#allocation7], 4
      %s46 = int_to_ptr.vmem [resolvable:$true] %s45
      %51 = dma.hbm_to_vmem [thread:$0]  %s3, 2048, %s46, [#allocation6], 128, 128, 8
    $region17: #{tpu_custom_call.1} parent=1 // pred_fallthru
      _
    // Predicated region
    $region18: #{tpu_custom_call.1} parent=1 // pred_check
      _
    $region19: #{tpu_custom_call.1} parent=1 // pred_check_branch
      %53 = sbr.rel (0) target = $region21
    $region20: #{tpu_custom_call.1} parent=1 // pred_region
      _
    $region21: #{tpu_custom_call.1} parent=1 // pred_fallthru
      _
    // Predicated region
    $region22: #{tpu_custom_call.1} parent=1 // pred_check
      _
    $region23: #{tpu_custom_call.1} parent=1 // pred_check_branch
      %55 = sbr.rel (0) target = $region25
    $region24: #{tpu_custom_call.1} parent=1 // pred_region
      _
    $region25: #{tpu_custom_call.1} parent=1 // pred_fallthru
      _
    // Predicated region
    $region26: #{tpu_custom_call.1} parent=1 // pred_check
      _
    $region27: #{tpu_custom_call.1} parent=1 // pred_check_branch
      %57 = sbr.rel (0) target = $region29
    $region28: #{tpu_custom_call.1} parent=1 // pred_region
      _
    $region29: #{tpu_custom_call.1} parent=1 // pred_fallthru
      _
    // Predicated region
    $region30: #{tpu_custom_call.1} parent=1 // pred_check
      _
    $region31: #{tpu_custom_call.1} parent=1 // pred_check_branch
      %59 = sbr.rel (0) target = $region33
    $region32: #{tpu_custom_call.1} parent=1 // pred_region
      %60 = dma.done [#allocation4], 128
    $region33: #{tpu_custom_call.1} parent=1 // pred_fallthru
      _
    // Predicated region
    $region34: #{tpu_custom_call.1} parent=1 // pred_check
      _
    $region35: #{tpu_custom_call.1} parent=1 // pred_check_branch
      %62 = sbr.rel (0) target = $region37
    $region36: #{tpu_custom_call.1} parent=1 // pred_region
      %63 = dma.done [#allocation6], 256
    $region37: #{tpu_custom_call.1} parent=1 // pred_fallthru
      _
    // Predicated region
    $region38: #{tpu_custom_call.1} parent=1 // pred_check
      _
    $region39: #{tpu_custom_call.1} parent=1 // pred_check_branch
      %65 = sbr.rel (0) target = $region41
    $region40: #{tpu_custom_call.1} parent=1 // pred_region
      %66 = dma.done [#allocation6], 2048
    $region41: #{tpu_custom_call.1} parent=1 // pred_fallthru
      _
    %v67 = vld [vmem:[#allocation3] sm:$0xff]
    %v68 = vld [vmem:[#allocation5] sm:$0xff]
    %v69 = vld [vmem:[#allocation5 + $0x8] sm:$0xff]
    %v70 = vld [vmem:[%s2] sm:$0x1]
    %v72 = vlaneseq
    %v73 = vshrl.u32 %v72, 7
    %v74 = vsub.s32 0, %v73
    %v75 = vrot.slane %v70, %v74
    %vm77 = vcmask 130048
    %v79 = vsel %vm77, %v67, 0
    %81 = vmatprep.subr.mxu0 0.0
    %82 = vmatpush1.msra.mxu0 %v68
    %83 = vmatprep.subr.mxu0 0.0
    %84 = vmatpush1.msra.mxu0 %v69
    %85 = vmatprep.subr.mxu0 0.0
    %86 = vmatpush1.msra.mxu0 0.0
    %87 = vmatprep.subr.mxu0 0.0
    %88 = vmatpush1.msra.mxu0 0.0
    %89 = vmatprep.subr.mxu0 0.0
    %90 = vmatpush1.msra.mxu0 0.0
    %91 = vmatprep.subr.mxu0 0.0
    %92 = vmatpush1.msra.mxu0 0.0
    %93 = vmatprep.subr.mxu0 0.0
    %94 = vmatpush1.msra.mxu0 0.0
    %95 = vmatprep.subr.mxu0 0.0
    %96 = vmatpush1.msra.mxu0 0.0
    %97 = vmatprep.subr.mxu0 0.0
    %98 = vmatpush1.msra.mxu0 0.0
    %99 = vmatprep.subr.mxu0 0.0
    %100 = vmatpush1.msra.mxu0 0.0
    %101 = vmatprep.subr.mxu0 0.0
    %102 = vmatpush1.msra.mxu0 0.0
    %103 = vmatprep.subr.mxu0 0.0
    %104 = vmatpush1.msra.mxu0 0.0
    %105 = vmatprep.subr.mxu0 0.0
    %106 = vmatpush1.msra.mxu0 0.0
    %107 = vmatprep.subr.mxu0 0.0
    %108 = vmatpush1.msra.mxu0 0.0
    %109 = vmatprep.subr.mxu0 0.0
    %110 = vmatpush1.msra.mxu0 0.0
    %111 = vmatprep.subr.mxu0 0.0
    %112 = vmatpush1.msra.mxu0 0.0
    %113 = vmatprep.subr.mxu0 0.0
    %114 = vmatpush1.msra.mxu0 0.0
    %115 = vmatprep.subr.mxu0 0.0
    %116 = vmatpush1.msra.mxu0 0.0
    %117 = vmatprep.subr.mxu0 0.0
    %118 = vmatpush1.msra.mxu0 0.0
    %119 = vmatprep.subr.mxu0 0.0
    %120 = vmatpush1.msra.mxu0 0.0
    %121 = vmatprep.subr.mxu0 0.0
    %122 = vmatpush1.msra.mxu0 0.0
    %123 = vmatprep.subr.mxu0 0.0
    %124 = vmatpush1.msra.mxu0 0.0
    %125 = vmatprep.subr.mxu0 0.0
    %126 = vmatpush1.msra.mxu0 0.0
    %127 = vmatprep.subr.mxu0 0.0
    %128 = vmatpush1.msra.mxu0 0.0
    %129 = vmatprep.subr.mxu0 0.0
    %130 = vmatpush1.msra.mxu0 0.0
    %131 = vmatprep.subr.mxu0 0.0
    %132 = vmatpush1.msra.mxu0 0.0
    %133 = vmatprep.subr.mxu0 0.0
    %134 = vmatpush1.msra.mxu0 0.0
    %135 = vmatprep.subr.mxu0 0.0
    %136 = vmatpush1.msra.mxu0 0.0
    %137 = vmatprep.subr.mxu0 0.0
    %138 = vmatpush1.msra.mxu0 0.0
    %139 = vmatprep.subr.mxu0 0.0
    %140 = vmatpush1.msra.mxu0 0.0
    %141 = vmatprep.subr.mxu0 0.0
    %142 = vmatpush1.msra.mxu0 0.0
    %143 = vmatprep.subr.mxu0 0.0
    %144 = vmatpush1.msra.mxu0 0.0
    %145 = vmatprep.mubr.f32.mxu0 0.0
    %146 = vmatmul.mubr.f32.gmra.mrb[0].mxu0 %v79
    %v147 = vpop.f32.mrb[0].mxu0
    %v148 = vadd.f32 %v75, %v147
    %v149 = vpop.f32.mrb[0].mxu0
    %150 = vdwg.mxu0
    %v151 = vmax.f32 %v148, 0.0
    %v152 = vld [vmem:[#allocation7] sm:$0xff]
    %v153 = vld [vmem:[#allocation7 + $0x8] sm:$0xff]
    %v154 = vld [vmem:[#allocation7 + $0x10] sm:$0xff]
    %v155 = vld [vmem:[#allocation7 + $0x18] sm:$0xff]
    %v156 = vld [vmem:[#allocation7 + $0x20] sm:$0xff]
    %v157 = vld [vmem:[#allocation7 + $0x28] sm:$0xff]
    %v158 = vld [vmem:[#allocation7 + $0x30] sm:$0xff]
    %v159 = vld [vmem:[#allocation7 + $0x38] sm:$0xff]
    %v160 = vld [vmem:[#allocation7 + $0x40] sm:$0xff]
    %v161 = vld [vmem:[#allocation7 + $0x48] sm:$0xff]
    %v162 = vld [vmem:[#allocation7 + $0x50] sm:$0xff]
    %v163 = vld [vmem:[#allocation7 + $0x58] sm:$0xff]
    %v164 = vld [vmem:[#allocation7 + $0x60] sm:$0xff]
    %v165 = vld [vmem:[#allocation7 + $0x68] sm:$0xff]
    %v166 = vld [vmem:[#allocation7 + $0x70] sm:$0xff]
    %v167 = vld [vmem:[#allocation7 + $0x78] sm:$0xff]
    %v168 = vld [vmem:[%s4] sm:$0x1]
    %v170 = vlaneseq
    %v171 = vshrl.u32 %v170, 7
    %v172 = vsub.s32 0, %v171
    %v173 = vrot.slane %v168, %v172
    %175 = vmatprep.subr.mxu0 0.0
    %176 = vmatpush1.msra.mxu0 %v152
    %177 = vmatprep.subr.mxu0 0.0
    %178 = vmatpush1.msra.mxu0 %v153
    %179 = vmatprep.subr.mxu0 0.0
    %180 = vmatpush1.msra.mxu0 %v154
    %181 = vmatprep.subr.mxu0 0.0
    %182 = vmatpush1.msra.mxu0 %v155
    %183 = vmatprep.subr.mxu0 0.0
    %184 = vmatpush1.msra.mxu0 %v156
    %185 = vmatprep.subr.mxu0 0.0
    %186 = vmatpush1.msra.mxu0 %v157
    %187 = vmatprep.subr.mxu0 0.0
    %188 = vmatpush1.msra.mxu0 %v158
    %189 = vmatprep.subr.mxu0 0.0
    %190 = vmatpush1.msra.mxu0 %v159
    %191 = vmatprep.subr.mxu0 0.0
    %192 = vmatpush1.msra.mxu0 %v160
    %193 = vmatprep.subr.mxu0 0.0
    %194 = vmatpush1.msra.mxu0 %v161
    %195 = vmatprep.subr.mxu0 0.0
    %196 = vmatpush1.msra.mxu0 %v162
    %197 = vmatprep.subr.mxu0 0.0
    %198 = vmatpush1.msra.mxu0 %v163
    %199 = vmatprep.subr.mxu0 0.0
    %200 = vmatpush1.msra.mxu0 %v164
    %201 = vmatprep.subr.mxu0 0.0
    %202 = vmatpush1.msra.mxu0 %v165
    %203 = vmatprep.subr.mxu0 0.0
    %204 = vmatpush1.msra.mxu0 %v166
    %205 = vmatprep.subr.mxu0 0.0
    %206 = vmatpush1.msra.mxu0 %v167
    %207 = vmatprep.subr.mxu0 0.0
    %208 = vmatpush1.msra.mxu0 0.0
    %209 = vmatprep.subr.mxu0 0.0
    %210 = vmatpush1.msra.mxu0 0.0
    %211 = vmatprep.subr.mxu0 0.0
    %212 = vmatpush1.msra.mxu0 0.0
    %213 = vmatprep.subr.mxu0 0.0
    %214 = vmatpush1.msra.mxu0 0.0
    %215 = vmatprep.subr.mxu0 0.0
    %216 = vmatpush1.msra.mxu0 0.0
    %217 = vmatprep.subr.mxu0 0.0
    %218 = vmatpush1.msra.mxu0 0.0
    %219 = vmatprep.subr.mxu0 0.0
    %220 = vmatpush1.msra.mxu0 0.0
    %221 = vmatprep.subr.mxu0 0.0
    %222 = vmatpush1.msra.mxu0 0.0
    %223 = vmatprep.subr.mxu0 0.0
    %224 = vmatpush1.msra.mxu0 0.0
    %225 = vmatprep.subr.mxu0 0.0
    %226 = vmatpush1.msra.mxu0 0.0
    %227 = vmatprep.subr.mxu0 0.0
    %228 = vmatpush1.msra.mxu0 0.0
    %229 = vmatprep.subr.mxu0 0.0
    %230 = vmatpush1.msra.mxu0 0.0
    %231 = vmatprep.subr.mxu0 0.0
    %232 = vmatpush1.msra.mxu0 0.0
    %233 = vmatprep.subr.mxu0 0.0
    %234 = vmatpush1.msra.mxu0 0.0
    %235 = vmatprep.subr.mxu0 0.0
    %236 = vmatpush1.msra.mxu0 0.0
    %237 = vmatprep.subr.mxu0 0.0
    %238 = vmatpush1.msra.mxu0 0.0
    %239 = vmatprep.mubr.f32.mxu0 0.0
    %240 = vmatmul.mubr.f32.gmra.mrb[0].mxu0 %v151
    %v241 = vpop.f32.mrb[0].mxu0
    %v242 = vadd.f32 %v173, %v241
    %v243 = vpop.f32.mrb[0].mxu0
    %244 = vdwg.mxu0
    %v245 = vmax.f32 %v242, 0.0
    %v246 = vld [vmem:[%s5] sm:$0x1]
    %v248 = vlaneseq
    %v249 = vshrl.u32 %v248, 7
    %v250 = vsub.s32 0, %v249
    %v251 = vrot.slane %v246, %v250
    %v253 = vmul.f32 %v245, %v251
    %254 = vadd.xlane.f32.xlu0 %v253
    %v255 = vpop.xlane.xlu0 %254
    %v256 = vld [vmem:[#allocation2] sm:$0x1]
    %v258 = vlaneseq
    %v259 = vshrl.u32 %v258, 7
    %v260 = vsub.s32 0, %v259
    %v261 = vrot.slane %v256, %v260
    %v263 = vadd.f32 %v255, %v261
    %vm264 = vcmask 7168
    %265 = vst.msk [vmem:[%s7] sm:$0xff] %vm264, %v263
    // Predicated region
    $region42: #{tpu_custom_call.1} parent=1 // pred_check
      _
    $region43: #{tpu_custom_call.1} parent=1 // pred_check_branch
      %267 = sbr.rel (0) target = $region45
    $region44: #{tpu_custom_call.1} parent=1 // pred_region
      _
    $region45: #{tpu_custom_call.1} parent=1 // pred_fallthru
      _
    // Predicated region
    $region46: #{tpu_custom_call.1} parent=1 // pred_check
      _
    $region47: #{tpu_custom_call.1} parent=1 // pred_check_branch
      %269 = sbr.rel (0) target = $region49
    $region48: #{tpu_custom_call.1} parent=1 // pred_region
      _
    $region49: #{tpu_custom_call.1} parent=1 // pred_fallthru
      _
    %270 = vsyncpa [#allocation4], 1
    %271 = vsyncpa [#allocation6], 1

</llo_original>
